<compile_context>
chip_gen: v6e
topology: v6e:2x2x1
jax: 0.10.0
libtpu: 0.0.40
codegen_flags: <defaults>
</compile_context>

<pallas_src>
import functools

import jax
import jax.numpy as jnp
import numpy as np
from jax.experimental import pallas as pl
from jax.experimental.pallas import tpu as pltpu


def _random_shift_kernel(shift_ref, x_ref, out_ref, pad_ref, *, pad, imgs_per_block):
    """Replicate-pad + integer-shift gather for a block of images.

    shift_ref : SMEM int32 (2*N,), scalar-prefetched; [2i] = x (width) shift,
                [2i+1] = y (height) shift, both in [0, 2*pad].
    x_ref     : VMEM (B, C, H, W) input block (source dtype, cast in-kernel).
    out_ref   : VMEM (B, C, H, W) float32 output block.
    pad_ref   : VMEM (B, C, H+2p, W+2p) float32 scratch (replicate-padded block).
    """
    bimg, c, h, w = x_ref.shape
    wp = w + 2 * pad
    gi = pl.program_id(0)

    # ---- fused float32 cast + replicate pad for the whole block (VMEM-only) ----
    imgs = x_ref[...].astype(jnp.float32)                               # (B,C,H,W)
    pad_ref[:, :, pad:pad + h, pad:pad + w] = imgs
    pad_ref[:, :, pad:pad + h, :pad] = jnp.broadcast_to(
        imgs[:, :, :, :1], (bimg, c, h, pad))
    pad_ref[:, :, pad:pad + h, pad + w:] = jnp.broadcast_to(
        imgs[:, :, :, w - 1:], (bimg, c, h, pad))
    top = pad_ref[:, :, pad:pad + 1, :]                                 # (B,C,1,Wp)
    pad_ref[:, :, :pad, :] = jnp.broadcast_to(top, (bimg, c, pad, wp))
    bot = pad_ref[:, :, pad + h - 1:pad + h, :]
    pad_ref[:, :, pad + h:, :] = jnp.broadcast_to(bot, (bimg, c, pad, wp))

    # ---- per-image integer-shift gather ----------------------------------------
    for b in range(imgs_per_block):
        idx = gi * imgs_per_block + b
        sx = shift_ref[2 * idx]       # width shift  (torch grid[..., 0])
        sy = shift_ref[2 * idx + 1]   # height shift (torch grid[..., 1])

        # Height shift: dynamic slice on the (non-lane) sublane dim of scratch.
        rows = pad_ref.at[b][:, pl.ds(sy, h), :]                        # (C, H, Wp)

        # Width shift: exactly one of the 2*pad+1 static lane-offset windows
        # runs at runtime (scf.if); all dynamic indexing stays off the lane dim.
        for k in range(2 * pad + 1):
            @pl.when(sx == k)
            def _(b=b, k=k, rows=rows):
                out_ref[b] = rows[:, :, k:k + w].astype(out_ref.dtype)


def _pick_imgs_per_block(n, per_img_bytes, budget_bytes=4 << 20):
    """Largest divisor of n with tile <= budget, preferring >= 2 grid steps."""
    cap = max(1, budget_bytes // max(per_img_bytes, 1))
    best = 1
    for b in range(1, n + 1):
        if n % b:
            continue
        if b > cap:
            break
        if n // b >= 2 or n == 1:
            best = b
    return best


def random_shifts_aug(x_nchw, pad, key):
    """Pallas TPU implementation of RandomShiftsAug.forward.

    x_nchw: (N, C, H, W) array (any real dtype); returns float32 (N, C, H, W).
    """
    n, c, h, w = x_nchw.shape
    assert h == w
    if pad == 0:
        return x_nchw.astype(jnp.float32)

    # Per-image integer shifts in [0, 2*pad]  (== torch.randint(0, 2*pad+1)
    # before the 2/(h+2*pad) grid normalization, which only converts the
    # integer shift into normalized grid units).
    # TODO(synk): torch's RNG stream (torch.randint) cannot be reproduced; we
    # use jax.random.randint with an explicit key instead.
    shifts = jax.random.randint(key, (n, 2), 0, 2 * pad + 1, dtype=jnp.int32)
    shifts_flat = shifts.reshape(-1)                   # (2N,) cheap 1-D SMEM

    hp, wp = h + 2 * pad, w + 2 * pad
    # VMEM per image in a block: double-buffered in/out tiles + padded scratch.
    per_img_bytes = (c * h * w * x_nchw.dtype.itemsize * 2   # input  (2 bufs)
                     + c * h * w * 4 * 2                      # f32 out (2 bufs)
                     + c * hp * wp * 4)                       # padded scratch
    bimg = _pick_imgs_per_block(n, per_img_bytes)

    kernel = functools.partial(_random_shift_kernel, pad=pad, imgs_per_block=bimg)

    return pl.pallas_call(
        kernel,
        out_shape=jax.ShapeDtypeStruct((n, c, h, w), jnp.float32),
        grid_spec=pltpu.PrefetchScalarGridSpec(
            num_scalar_prefetch=1,
            grid=(n // bimg,),
            in_specs=[pl.BlockSpec((bimg, c, h, w), lambda i, s: (i, 0, 0, 0))],
            out_specs=pl.BlockSpec((bimg, c, h, w), lambda i, s: (i, 0, 0, 0)),
            scratch_shapes=[pltpu.VMEM((bimg, c, hp, wp), jnp.float32)],
        ),
        compiler_params=pltpu.CompilerParams(
            dimension_semantics=("parallel",),
        ),
    )(shifts_flat, x_nchw)


def _reference(x_nchw, pad, shifts):
    """NumPy reference: replicate pad + integer-shift gather (== grid_sample here)."""
    x = np.asarray(x_nchw, dtype=np.float32)
    n, c, h, w = x.shape
    xp = np.pad(x, ((0, 0), (0, 0), (pad, pad), (pad, pad)), mode="edge")
    out = np.empty_like(x)
    for b in range(n):
        sx, sy = int(shifts[b, 0]), int(shifts[b, 1])
        out[b] = xp[b, :, sy:sy + h, sx:sx + w]
    return out


if __name__ == "__main__":
    key = jax.random.PRNGKey(0)
    kx, kshift = jax.random.split(key)

    n, c, h, w = 2, 4, 16, 16
    pad = 4  # RandomShiftsAug(pad=4)

    x = jax.random.normal(kx, (n, c, h, w), dtype=jnp.float32)

    out = jax.block_until_ready(random_shifts_aug(x, pad, kshift))

    assert out.shape == (n, c, h, w)
    assert out.dtype == jnp.float32

    shifts = np.asarray(
        jax.random.randint(kshift, (n, 2), 0, 2 * pad + 1, dtype=jnp.int32))
    ref = _reference(x, pad, shifts)
    np.testing.assert_allclose(np.asarray(out), ref, rtol=1e-6, atol=1e-6)

    print("KERNEL_OK")
</pallas_src>

<mosaic_0001>
module attributes {stable_mosaic.version = 11 : i64} {
  func.func @_random_shift_kernel(%arg0: i32, %arg1: memref<4xi32, #tpu.memory_space<smem>>, %arg2: memref<1x4x16x16xf32, #tpu.memory_space<vmem>>, %arg3: memref<1x4x16x16xf32, #tpu.memory_space<vmem>>, %arg4: memref<1x4x24x24xf32, #tpu.memory_space<vmem>>) attributes {dimension_semantics = [#tpu.dimension_semantics<parallel>], iteration_bounds = array<i64: 2>, scalar_prefetch = 1 : i64, scratch_operands = 1 : i64, tpu.core_type = #tpu.core_type<tc>, window_params = [{transform_indices = @transform_0, window_bounds = array<i64: 1, 4, 16, 16>}, {transform_indices = @transform_1, window_bounds = array<i64: 1, 4, 16, 16>}]} {
    %c0 = arith.constant 0 : index
    %c0_0 = arith.constant 0 : index
    %c0_1 = arith.constant 0 : index
    %c0_2 = arith.constant 0 : index
    %0 = vector.load %arg2[%c0, %c0_0, %c0_1, %c0_2] : memref<1x4x16x16xf32, #tpu.memory_space<vmem>>, vector<1x4x16x16xf32>
    %c0_3 = arith.constant 0 : index
    %c0_4 = arith.constant 0 : index
    %c4 = arith.constant 4 : index
    %c4_5 = arith.constant 4 : index
    %1 = vector.load %arg4[%c0_3, %c0_4, %c4, %c4_5] : memref<1x4x24x24xf32, #tpu.memory_space<vmem>>, vector<1x4x16x16xf32>
    tpu.vector_store %arg4[%c0_3, %c0_4, %c4, %c4_5], %0 {strides = array<i32>} : memref<1x4x24x24xf32, #tpu.memory_space<vmem>>, vector<1x4x16x16xf32>,
    %2 = vector.extract_strided_slice %0 {offsets = [0, 0, 0, 0], sizes = [1, 4, 16, 1], strides = [1, 1, 1, 1]} : vector<1x4x16x16xf32> to vector<1x4x16x1xf32>
    %3 = vector.shape_cast %2 : vector<1x4x16x1xf32> to vector<1x4x16x1xf32>
    %4 = vector.broadcast %3 : vector<1x4x16x1xf32> to vector<1x4x16x4xf32>
    %c0_6 = arith.constant 0 : index
    %c0_7 = arith.constant 0 : index
    %c4_8 = arith.constant 4 : index
    %c0_9 = arith.constant 0 : index
    %5 = vector.load %arg4[%c0_6, %c0_7, %c4_8, %c0_9] : memref<1x4x24x24xf32, #tpu.memory_space<vmem>>, vector<1x4x16x4xf32>
    tpu.vector_store %arg4[%c0_6, %c0_7, %c4_8, %c0_9], %4 {strides = array<i32>} : memref<1x4x24x24xf32, #tpu.memory_space<vmem>>, vector<1x4x16x4xf32>,
    %6 = vector.extract_strided_slice %0 {offsets = [0, 0, 0, 15], sizes = [1, 4, 16, 1], strides = [1, 1, 1, 1]} : vector<1x4x16x16xf32> to vector<1x4x16x1xf32>
    %7 = vector.shape_cast %6 : vector<1x4x16x1xf32> to vector<1x4x16x1xf32>
    %8 = vector.broadcast %7 : vector<1x4x16x1xf32> to vector<1x4x16x4xf32>
    %c0_10 = arith.constant 0 : index
    %c0_11 = arith.constant 0 : index
    %c4_12 = arith.constant 4 : index
    %c20 = arith.constant 20 : index
    %9 = vector.load %arg4[%c0_10, %c0_11, %c4_12, %c20] : memref<1x4x24x24xf32, #tpu.memory_space<vmem>>, vector<1x4x16x4xf32>
    tpu.vector_store %arg4[%c0_10, %c0_11, %c4_12, %c20], %8 {strides = array<i32>} : memref<1x4x24x24xf32, #tpu.memory_space<vmem>>, vector<1x4x16x4xf32>,
    %c0_13 = arith.constant 0 : index
    %c0_14 = arith.constant 0 : index
    %c4_15 = arith.constant 4 : index
    %c0_16 = arith.constant 0 : index
    %10 = vector.load %arg4[%c0_13, %c0_14, %c4_15, %c0_16] : memref<1x4x24x24xf32, #tpu.memory_space<vmem>>, vector<1x4x1x24xf32>
    %11 = vector.shape_cast %10 : vector<1x4x1x24xf32> to vector<1x4x1x24xf32>
    %12 = vector.broadcast %11 : vector<1x4x1x24xf32> to vector<1x4x4x24xf32>
    %c0_17 = arith.constant 0 : index
    %c0_18 = arith.constant 0 : index
    %c0_19 = arith.constant 0 : index
    %c0_20 = arith.constant 0 : index
    %13 = vector.load %arg4[%c0_17, %c0_18, %c0_19, %c0_20] : memref<1x4x24x24xf32, #tpu.memory_space<vmem>>, vector<1x4x4x24xf32>
    tpu.vector_store %arg4[%c0_17, %c0_18, %c0_19, %c0_20], %12 {strides = array<i32>} : memref<1x4x24x24xf32, #tpu.memory_space<vmem>>, vector<1x4x4x24xf32>,
    %c0_21 = arith.constant 0 : index
    %c0_22 = arith.constant 0 : index
    %c19 = arith.constant 19 : index
    %c0_23 = arith.constant 0 : index
    %14 = vector.load %arg4[%c0_21, %c0_22, %c19, %c0_23] : memref<1x4x24x24xf32, #tpu.memory_space<vmem>>, vector<1x4x1x24xf32>
    %15 = vector.shape_cast %14 : vector<1x4x1x24xf32> to vector<1x4x1x24xf32>
    %16 = vector.broadcast %15 : vector<1x4x1x24xf32> to vector<1x4x4x24xf32>
    %c0_24 = arith.constant 0 : index
    %c0_25 = arith.constant 0 : index
    %c20_26 = arith.constant 20 : index
    %c0_27 = arith.constant 0 : index
    %17 = vector.load %arg4[%c0_24, %c0_25, %c20_26, %c0_27] : memref<1x4x24x24xf32, #tpu.memory_space<vmem>>, vector<1x4x4x24xf32>
    tpu.vector_store %arg4[%c0_24, %c0_25, %c20_26, %c0_27], %16 {strides = array<i32>} : memref<1x4x24x24xf32, #tpu.memory_space<vmem>>, vector<1x4x4x24xf32>,
    %c1_i32 = arith.constant 1 : i32
    %18 = arith.muli %arg0, %c1_i32 : i32
    %c0_i32 = arith.constant 0 : i32
    %19 = arith.addi %18, %c0_i32 : i32
    %c2_i32 = arith.constant 2 : i32
    %20 = arith.muli %c2_i32, %19 : i32
    %21 = arith.index_cast %20 : i32 to index
    %22 = memref.load %arg1[%21] : memref<4xi32, #tpu.memory_space<smem>>
    %c2_i32_28 = arith.constant 2 : i32
    %23 = arith.muli %c2_i32_28, %19 : i32
    %c1_i32_29 = arith.constant 1 : i32
    %24 = arith.addi %23, %c1_i32_29 : i32
    %25 = arith.index_cast %24 : i32 to index
    %26 = memref.load %arg1[%25] : memref<4xi32, #tpu.memory_space<smem>>
    %c0_i32_30 = arith.constant 0 : i32
    %c0_i32_31 = arith.constant 0 : i32
    %c0_i32_32 = arith.constant 0 : i32
    %c0_i32_33 = arith.constant 0 : i32
    %27 = tpu.memref_slice %arg4[%c0_i32_30, %c0_i32_31, %c0_i32_32, %c0_i32_33] : memref<1x4x24x24xf32, #tpu.memory_space<vmem>> -> memref<1x4x24x24xf32, #tpu.memory_space<vmem>>
    %28 = tpu.memref_squeeze %27 : memref<1x4x24x24xf32, #tpu.memory_space<vmem>> -> memref<4x24x24xf32, #tpu.memory_space<vmem>>
    %c0_34 = arith.constant 0 : index
    %29 = arith.index_cast %26 : i32 to index
    %c0_35 = arith.constant 0 : index
    %30 = vector.load %28[%c0_34, %29, %c0_35] : memref<4x24x24xf32, #tpu.memory_space<vmem>>, vector<4x16x24xf32>
    %c0_i32_36 = arith.constant 0 : i32
    %31 = arith.cmpi eq, %22, %c0_i32_36 : i32
    %32 = arith.extui %31 : i1 to i32
    %c0_i32_37 = arith.constant 0 : i32
    %33 = arith.cmpi ne, %32, %c0_i32_37 : i32
    scf.if %33 {
      %58 = vector.extract_strided_slice %30 {offsets = [0, 0, 0], sizes = [4, 16, 16], strides = [1, 1, 1]} : vector<4x16x24xf32> to vector<4x16x16xf32>
      %c0_48 = arith.constant 0 : index
      %c0_49 = arith.constant 0 : index
      %c0_50 = arith.constant 0 : index
      %c0_51 = arith.constant 0 : index
      %59 = vector.load %arg3[%c0_48, %c0_49, %c0_50, %c0_51] : memref<1x4x16x16xf32, #tpu.memory_space<vmem>>, vector<1x4x16x16xf32>
      %60 = vector.shape_cast %59 : vector<1x4x16x16xf32> to vector<4x16x16xf32>
      %61 = vector.shape_cast %58 : vector<4x16x16xf32> to vector<1x4x16x16xf32>
      tpu.vector_store %arg3[%c0_48, %c0_49, %c0_50, %c0_51], %61 {strides = array<i32>} : memref<1x4x16x16xf32, #tpu.memory_space<vmem>>, vector<1x4x16x16xf32>,
    } else {
    }
    %c1_i32_38 = arith.constant 1 : i32
    %34 = arith.cmpi eq, %22, %c1_i32_38 : i32
    %35 = arith.extui %34 : i1 to i32
    %c0_i32_39 = arith.constant 0 : i32
    %36 = arith.cmpi ne, %35, %c0_i32_39 : i32
    scf.if %36 {
      %58 = vector.extract_strided_slice %30 {offsets = [0, 0, 1], sizes = [4, 16, 16], strides = [1, 1, 1]} : vector<4x16x24xf32> to vector<4x16x16xf32>
      %c0_48 = arith.constant 0 : index
      %c0_49 = arith.constant 0 : index
      %c0_50 = arith.constant 0 : index
      %c0_51 = arith.constant 0 : index
      %59 = vector.load %arg3[%c0_48, %c0_49, %c0_50, %c0_51] : memref<1x4x16x16xf32, #tpu.memory_space<vmem>>, vector<1x4x16x16xf32>
      %60 = vector.shape_cast %59 : vector<1x4x16x16xf32> to vector<4x16x16xf32>
      %61 = vector.shape_cast %58 : vector<4x16x16xf32> to vector<1x4x16x16xf32>
      tpu.vector_store %arg3[%c0_48, %c0_49, %c0_50, %c0_51], %61 {strides = array<i32>} : memref<1x4x16x16xf32, #tpu.memory_space<vmem>>, vector<1x4x16x16xf32>,
    } else {
    }
    %c2_i32_40 = arith.constant 2 : i32
    %37 = arith.cmpi eq, %22, %c2_i32_40 : i32
    %38 = arith.extui %37 : i1 to i32
    %c0_i32_41 = arith.constant 0 : i32
    %39 = arith.cmpi ne, %38, %c0_i32_41 : i32
    scf.if %39 {
      %58 = vector.extract_strided_slice %30 {offsets = [0, 0, 2], sizes = [4, 16, 16], strides = [1, 1, 1]} : vector<4x16x24xf32> to vector<4x16x16xf32>
      %c0_48 = arith.constant 0 : index
      %c0_49 = arith.constant 0 : index
      %c0_50 = arith.constant 0 : index
      %c0_51 = arith.constant 0 : index
      %59 = vector.load %arg3[%c0_48, %c0_49, %c0_50, %c0_51] : memref<1x4x16x16xf32, #tpu.memory_space<vmem>>, vector<1x4x16x16xf32>
      %60 = vector.shape_cast %59 : vector<1x4x16x16xf32> to vector<4x16x16xf32>
      %61 = vector.shape_cast %58 : vector<4x16x16xf32> to vector<1x4x16x16xf32>
      tpu.vector_store %arg3[%c0_48, %c0_49, %c0_50, %c0_51], %61 {strides = array<i32>} : memref<1x4x16x16xf32, #tpu.memory_space<vmem>>, vector<1x4x16x16xf32>,
    } else {
    }
    %c3_i32 = arith.constant 3 : i32
    %40 = arith.cmpi eq, %22, %c3_i32 : i32
    %41 = arith.extui %40 : i1 to i32
    %c0_i32_42 = arith.constant 0 : i32
    %42 = arith.cmpi ne, %41, %c0_i32_42 : i32
    scf.if %42 {
      %58 = vector.extract_strided_slice %30 {offsets = [0, 0, 3], sizes = [4, 16, 16], strides = [1, 1, 1]} : vector<4x16x24xf32> to vector<4x16x16xf32>
      %c0_48 = arith.constant 0 : index
      %c0_49 = arith.constant 0 : index
      %c0_50 = arith.constant 0 : index
      %c0_51 = arith.constant 0 : index
      %59 = vector.load %arg3[%c0_48, %c0_49, %c0_50, %c0_51] : memref<1x4x16x16xf32, #tpu.memory_space<vmem>>, vector<1x4x16x16xf32>
      %60 = vector.shape_cast %59 : vector<1x4x16x16xf32> to vector<4x16x16xf32>
      %61 = vector.shape_cast %58 : vector<4x16x16xf32> to vector<1x4x16x16xf32>
      tpu.vector_store %arg3[%c0_48, %c0_49, %c0_50, %c0_51], %61 {strides = array<i32>} : memref<1x4x16x16xf32, #tpu.memory_space<vmem>>, vector<1x4x16x16xf32>,
    } else {
    }
    %c4_i32 = arith.constant 4 : i32
    %43 = arith.cmpi eq, %22, %c4_i32 : i32
    %44 = arith.extui %43 : i1 to i32
    %c0_i32_43 = arith.constant 0 : i32
    %45 = arith.cmpi ne, %44, %c0_i32_43 : i32
    scf.if %45 {
      %58 = vector.extract_strided_slice %30 {offsets = [0, 0, 4], sizes = [4, 16, 16], strides = [1, 1, 1]} : vector<4x16x24xf32> to vector<4x16x16xf32>
      %c0_48 = arith.constant 0 : index
      %c0_49 = arith.constant 0 : index
      %c0_50 = arith.constant 0 : index
      %c0_51 = arith.constant 0 : index
      %59 = vector.load %arg3[%c0_48, %c0_49, %c0_50, %c0_51] : memref<1x4x16x16xf32, #tpu.memory_space<vmem>>, vector<1x4x16x16xf32>
      %60 = vector.shape_cast %59 : vector<1x4x16x16xf32> to vector<4x16x16xf32>
      %61 = vector.shape_cast %58 : vector<4x16x16xf32> to vector<1x4x16x16xf32>
      tpu.vector_store %arg3[%c0_48, %c0_49, %c0_50, %c0_51], %61 {strides = array<i32>} : memref<1x4x16x16xf32, #tpu.memory_space<vmem>>, vector<1x4x16x16xf32>,
    } else {
    }
    %c5_i32 = arith.constant 5 : i32
    %46 = arith.cmpi eq, %22, %c5_i32 : i32
    %47 = arith.extui %46 : i1 to i32
    %c0_i32_44 = arith.constant 0 : i32
    %48 = arith.cmpi ne, %47, %c0_i32_44 : i32
    scf.if %48 {
      %58 = vector.extract_strided_slice %30 {offsets = [0, 0, 5], sizes = [4, 16, 16], strides = [1, 1, 1]} : vector<4x16x24xf32> to vector<4x16x16xf32>
      %c0_48 = arith.constant 0 : index
      %c0_49 = arith.constant 0 : index
      %c0_50 = arith.constant 0 : index
      %c0_51 = arith.constant 0 : index
      %59 = vector.load %arg3[%c0_48, %c0_49, %c0_50, %c0_51] : memref<1x4x16x16xf32, #tpu.memory_space<vmem>>, vector<1x4x16x16xf32>
      %60 = vector.shape_cast %59 : vector<1x4x16x16xf32> to vector<4x16x16xf32>
      %61 = vector.shape_cast %58 : vector<4x16x16xf32> to vector<1x4x16x16xf32>
      tpu.vector_store %arg3[%c0_48, %c0_49, %c0_50, %c0_51], %61 {strides = array<i32>} : memref<1x4x16x16xf32, #tpu.memory_space<vmem>>, vector<1x4x16x16xf32>,
    } else {
    }
    %c6_i32 = arith.constant 6 : i32
    %49 = arith.cmpi eq, %22, %c6_i32 : i32
    %50 = arith.extui %49 : i1 to i32
    %c0_i32_45 = arith.constant 0 : i32
    %51 = arith.cmpi ne, %50, %c0_i32_45 : i32
    scf.if %51 {
      %58 = vector.extract_strided_slice %30 {offsets = [0, 0, 6], sizes = [4, 16, 16], strides = [1, 1, 1]} : vector<4x16x24xf32> to vector<4x16x16xf32>
      %c0_48 = arith.constant 0 : index
      %c0_49 = arith.constant 0 : index
      %c0_50 = arith.constant 0 : index
      %c0_51 = arith.constant 0 : index
      %59 = vector.load %arg3[%c0_48, %c0_49, %c0_50, %c0_51] : memref<1x4x16x16xf32, #tpu.memory_space<vmem>>, vector<1x4x16x16xf32>
      %60 = vector.shape_cast %59 : vector<1x4x16x16xf32> to vector<4x16x16xf32>
      %61 = vector.shape_cast %58 : vector<4x16x16xf32> to vector<1x4x16x16xf32>
      tpu.vector_store %arg3[%c0_48, %c0_49, %c0_50, %c0_51], %61 {strides = array<i32>} : memref<1x4x16x16xf32, #tpu.memory_space<vmem>>, vector<1x4x16x16xf32>,
    } else {
    }
    %c7_i32 = arith.constant 7 : i32
    %52 = arith.cmpi eq, %22, %c7_i32 : i32
    %53 = arith.extui %52 : i1 to i32
    %c0_i32_46 = arith.constant 0 : i32
    %54 = arith.cmpi ne, %53, %c0_i32_46 : i32
    scf.if %54 {
      %58 = vector.extract_strided_slice %30 {offsets = [0, 0, 7], sizes = [4, 16, 16], strides = [1, 1, 1]} : vector<4x16x24xf32> to vector<4x16x16xf32>
      %c0_48 = arith.constant 0 : index
      %c0_49 = arith.constant 0 : index
      %c0_50 = arith.constant 0 : index
      %c0_51 = arith.constant 0 : index
      %59 = vector.load %arg3[%c0_48, %c0_49, %c0_50, %c0_51] : memref<1x4x16x16xf32, #tpu.memory_space<vmem>>, vector<1x4x16x16xf32>
      %60 = vector.shape_cast %59 : vector<1x4x16x16xf32> to vector<4x16x16xf32>
      %61 = vector.shape_cast %58 : vector<4x16x16xf32> to vector<1x4x16x16xf32>
      tpu.vector_store %arg3[%c0_48, %c0_49, %c0_50, %c0_51], %61 {strides = array<i32>} : memref<1x4x16x16xf32, #tpu.memory_space<vmem>>, vector<1x4x16x16xf32>,
    } else {
    }
    %c8_i32 = arith.constant 8 : i32
    %55 = arith.cmpi eq, %22, %c8_i32 : i32
    %56 = arith.extui %55 : i1 to i32
    %c0_i32_47 = arith.constant 0 : i32
    %57 = arith.cmpi ne, %56, %c0_i32_47 : i32
    scf.if %57 {
      %58 = vector.extract_strided_slice %30 {offsets = [0, 0, 8], sizes = [4, 16, 16], strides = [1, 1, 1]} : vector<4x16x24xf32> to vector<4x16x16xf32>
      %c0_48 = arith.constant 0 : index
      %c0_49 = arith.constant 0 : index
      %c0_50 = arith.constant 0 : index
      %c0_51 = arith.constant 0 : index
      %59 = vector.load %arg3[%c0_48, %c0_49, %c0_50, %c0_51] : memref<1x4x16x16xf32, #tpu.memory_space<vmem>>, vector<1x4x16x16xf32>
      %60 = vector.shape_cast %59 : vector<1x4x16x16xf32> to vector<4x16x16xf32>
      %61 = vector.shape_cast %58 : vector<4x16x16xf32> to vector<1x4x16x16xf32>
      tpu.vector_store %arg3[%c0_48, %c0_49, %c0_50, %c0_51], %61 {strides = array<i32>} : memref<1x4x16x16xf32, #tpu.memory_space<vmem>>, vector<1x4x16x16xf32>,
    } else {
    }
    return
  }
  func.func @transform_0(%arg0: i32, %arg1: memref<4xi32, #tpu.memory_space<smem>>) -> (i32, i32, i32, i32) {
    %c0_i32 = arith.constant 0 : i32
    %c0_i32_0 = arith.constant 0 : i32
    %c0_i32_1 = arith.constant 0 : i32
    %c0_i32_2 = arith.constant 0 : i32
    return %arg0, %c0_i32, %c0_i32_0, %c0_i32_1 : i32, i32, i32, i32
  }
  func.func @transform_1(%arg0: i32, %arg1: memref<4xi32, #tpu.memory_space<smem>>) -> (i32, i32, i32, i32) {
    %c0_i32 = arith.constant 0 : i32
    %c0_i32_0 = arith.constant 0 : i32
    %c0_i32_1 = arith.constant 0 : i32
    %c0_i32_2 = arith.constant 0 : i32
    return %arg0, %c0_i32, %c0_i32_0, %c0_i32_1 : i32, i32, i32, i32
  }
}

</mosaic_0001>

<llo_original>
// kernel: tpu_custom_call.1
$region0: #{tpu_custom_call.1}
  #allocation0 [shape = 'u32[]', space=smem, size = 0x4, offset = 0x4, fixed_abs, tag = 'smem constant byte address 0x4 - core index']
  #allocation1 [shape = 'u32[144,128]{1,0:T(1,128)}', space=vmem, size = 0x12000, scoped, tag = 'internal scratch']
  #allocation2 [shape = 'f32[1,4,24,24]{3,2,1,0:T(8,128)}', space=vmem, size = 0xc000, scoped, tag = 'scratch operand']
  #allocation3 [shape = 's32[1]{0}', space=sflag, size = 0x4, scoped, tag = 'scoped memory for tpu_custom_call.1']
  #allocation4 [shape = 'u8[512]{0}', space=smem, size = 0x200, scoped, tag = 'prefetched SMEM operand 0']
  %s0 = inlined_call_operand.hbm [shape: s32[4], index: 0, kind: input, shape index: {}]
  %s1 = inlined_call_operand.hbm [shape: f32[2,4,16,16], index: 1, kind: input, shape index: {}]
  %s2 = inlined_call_operand.hbm [shape: f32[2,4,16,16], index: 2, kind: output, shape index: {}]
  %s3 = sld [smem:[#allocation0]]
  $region77: #{tpu_custom_call.1} parent=0
    _
  %s5 = ssub.s32 1, %s3
  %s6 = scalar_select 0, %s5, %s3
  %8 = dma.hbm_to_smem %s0, 16, [#allocation4], [#allocation3]
  %9 = dma.done [#allocation3], 16
  %10 = sfence
  $region1: #{tpu_custom_call.1} parent=0
    #allocation5 [shape = 'u8[65536]{0}', space=vmem, size = 0x10000, scoped, tag = 'input window, operand 1']
    #allocation6 [shape = 's32[2]{0}', space=sflag, size = 0x8, scoped, tag = 'scoped memory for tpu_custom_call.1']
    #allocation7 [shape = 's32[2]{0}', space=sflag, size = 0x8, scoped, tag = 'scoped memory for tpu_custom_call.1']
    #allocation8 [shape = 'u8[65536]{0}', space=vmem, size = 0x10000, scoped, tag = 'output window, operand 0']
    %11 = vsyncpa [#allocation6], 0
    %s12 = scalar_lea.sflag [#allocation6], 1
    %13 = vsyncpa %s12, 0
    %14 = vsyncpa [#allocation7], 0
    %s15 = scalar_lea.sflag [#allocation7], 1
    %16 = vsyncpa %s15, 0
    loop: start=0, step=1, limit=4
    $region2: #{tpu_custom_call.1} parent=1 // loop_pre_header
      _
    $region3: #{tpu_custom_call.1} parent=1 // loop_header
      %s18 = sphi 0, %s22
      %p19 = scmp.ge.s32.totalorder %s18, 4
      %s28 = sphi 0, %s30
      %s31 = sphi 0, %s28
      %s32 = sphi 0, %s31
      %s48 = sphi 0, %s32
      %s54 = sphi 0, %s56
      %s57 = sphi 0, %s54
      %s58 = sphi 0, %s57
      %s74 = sphi 0, %s58
    $region4: #{tpu_custom_call.1} parent=1 // loop_header_branch
      %21 = sbr.rel (%p19) target = $region8
    $region5: #{tpu_custom_call.1} parent=1 // loop_body
      %s23 = ssub.s32 %s18, 1
      %s24 = ssub.s32 %s18, 2
      %s25 = sadd.s32 %s18, 1
      %s26 = ssub.s32 %s18, %s25
      %p27 = scmp.eq.s32.totalorder %s26, 0
      %s29 = sadd.s32 %s28, 1
      %s30 = scalar_select %p27, %s28, %s29
      %p33 = pneg %p27
      %p34 = scmp.eq.s32.totalorder %s18, 1
      %p35 = por %p33, %p34
      %p36 = scmp.ne.s32.totalorder %s28, %s31
      %p37 = scmp.eq.s32.totalorder %s18, 0
      %p38 = por %p36, %p37
      %p39 = scmp.ne.s32.totalorder %s28, %s31
      %p40 = scmp.eq.s32.totalorder %s23, 1
      %p41 = por %p39, %p40
      %p42 = scmp.ne.s32.totalorder %s31, %s32
      %p43 = scmp.eq.s32.totalorder %s23, 0
      %p44 = por %p42, %p43
      %p45 = scmp.ne.s32.totalorder %s31, %s32
      %p46 = scmp.eq.s32.totalorder %s24, 1
      %p47 = por %p45, %p46
      %p49 = scmp.ne.s32.totalorder %s32, %s48
      %p50 = scmp.eq.s32.totalorder %s24, 0
      %p51 = por %p49, %p50
      %s52 = ssub.s32 %s18, %s25
      %p53 = scmp.eq.s32.totalorder %s52, 0
      %s55 = sadd.s32 %s54, 1
      %s56 = scalar_select %p53, %s54, %s55
      %p59 = pneg %p53
      %p60 = scmp.eq.s32.totalorder %s18, 1
      %p61 = por %p59, %p60
      %p62 = scmp.ne.s32.totalorder %s54, %s57
      %p63 = scmp.eq.s32.totalorder %s18, 0
      %p64 = por %p62, %p63
      %p65 = scmp.ne.s32.totalorder %s54, %s57
      %p66 = scmp.eq.s32.totalorder %s23, 1
      %p67 = por %p65, %p66
      %p68 = scmp.ne.s32.totalorder %s57, %s58
      %p69 = scmp.eq.s32.totalorder %s23, 0
      %p70 = por %p68, %p69
      %p71 = scmp.ne.s32.totalorder %s57, %s58
      %p72 = scmp.eq.s32.totalorder %s24, 1
      %p73 = por %p71, %p72
      %p75 = scmp.ne.s32.totalorder %s58, %s74
      %p76 = scmp.eq.s32.totalorder %s24, 0
      %p77 = por %p75, %p76
      %p78 = scmp.le.s32.totalorder 1, %s18
      %p79 = scmp.lt.s32.totalorder %s18, 3
      %p80 = pnand %p78, %p79
      %p81 = pneg %p80
      // Predicated region
      $region9: #{tpu_custom_call.1} parent=5 // pred_check
        _
      $region10: #{tpu_custom_call.1} parent=5 // pred_check_branch
        %83 = sbr.rel (%p80) target = $region12
      $region11: #{tpu_custom_call.1} parent=5 // pred_region
        %s84 = ssub.s32 %s18, 1
      $region12: #{tpu_custom_call.1} parent=5 // pred_fallthru
        _
      %p85 = scmp.lt.s32.totalorder %s18, 2
      // Predicated region
      $region13: #{tpu_custom_call.1} parent=5 // pred_check
        %p86 = pneg %p85
      $region14: #{tpu_custom_call.1} parent=5 // pred_check_branch
        %88 = sbr.rel (%p86) target = $region16
      $region15: #{tpu_custom_call.1} parent=5 // pred_region
        // Predicated region
        $region17: #{tpu_custom_call.1} parent=15 // pred_check
          %p89 = pneg %p38
        $region18: #{tpu_custom_call.1} parent=15 // pred_check_branch
          %91 = sbr.rel (%p89) target = $region20
        $region19: #{tpu_custom_call.1} parent=15 // pred_region
          %s92 = sand.u32 %s28, 1
          %s93 = scalar_lea.sflag [#allocation6], %s92
          %s94 = sand.u32 %s28, 1
          %s95 = smul.addr %s94, 64
          %s96 = scalar_lea.vmem [#allocation5], %s95
          %s98 = ssub.s32 1024, 1024
          %99 = vsyncadd %s93, %s98
          %s100 = smul.addr %s18, 8
          %s101 = smul.addr %s100, 128
          %s102 = scalar_lea.hbm %s1, %s101
          %s103 = sshll.u32 %s96, 4
          %s104 = int_to_ptr.vmem [resolvable:$true] %s103
          %109 = dma.hbm_to_vmem [thread:$0]  %s102, 1024, %s104, %s93, 128, 128, 8
        $region20: #{tpu_custom_call.1} parent=15 // pred_fallthru
          _
      $region16: #{tpu_custom_call.1} parent=5 // pred_fallthru
        _
      %p110 = scmp.le.s32.totalorder 1, %s18
      %p111 = scmp.lt.s32.totalorder %s18, 3
      %p112 = pnand %p110, %p111
      %p113 = pneg %p112
      // Predicated region
      $region21: #{tpu_custom_call.1} parent=5 // pred_check
        _
      $region22: #{tpu_custom_call.1} parent=5 // pred_check_branch
        %115 = sbr.rel (%p112) target = $region24
      $region23: #{tpu_custom_call.1} parent=5 // pred_region
        %s116 = ssub.s32 %s18, 1
        %s117 = sand.u32 %s31, 1
        %s118 = scalar_lea.sflag [#allocation6], %s117
        %s119 = sand.u32 %s31, 1
        %s120 = smul.addr %s119, 64
        %s121 = scalar_lea.vmem [#allocation5], %s120
        // Predicated region
        $region25: #{tpu_custom_call.1} parent=23 // pred_check
          %p122 = pneg %p44
        $region26: #{tpu_custom_call.1} parent=23 // pred_check_branch
          %124 = sbr.rel (%p122) target = $region28
        $region27: #{tpu_custom_call.1} parent=23 // pred_region
          %125 = dma.done %s118, 1024
        $region28: #{tpu_custom_call.1} parent=23 // pred_fallthru
          _
        %s126 = sand.u32 %s31, 1
        %s127 = scalar_lea.sflag [#allocation6], %s126
        %s128 = sand.u32 %s31, 1
        %s129 = smul.addr %s128, 64
        %s130 = scalar_lea.vmem [#allocation5], %s129
        %p131 = pneg %p44
        %p132 = pneg %p41
        %p133 = pneg %p70
        %p134 = pneg %p67
        %s135 = sand.u32 %s57, 1
        %s136 = scalar_lea.sflag [#allocation7], %s135
        %s137 = sand.u32 %s57, 1
        %s138 = smul.addr %s137, 64
        %s139 = scalar_lea.vmem [#allocation8], %s138
        %v140 = vld [vmem:[%s121] sm:$0xff]
        %v141 = vld [vmem:[%s121 + $0x8] sm:$0xff]
        %v142 = vld [vmem:[%s121 + $0x10] sm:$0xff]
        %v143 = vld [vmem:[%s121 + $0x18] sm:$0xff]
        %v144 = vld [vmem:[%s121 + $0x20] sm:$0xff]
        %v145 = vld [vmem:[%s121 + $0x28] sm:$0xff]
        %v146 = vld [vmem:[%s121 + $0x30] sm:$0xff]
        %v147 = vld [vmem:[%s121 + $0x38] sm:$0xff]
        %156 = vrot.lane.b32.xlu0 %v140, 4
        %v157 = vpop.permute.xlu0 %156
        %158 = vrot.lane.b32.xlu0 %v141, 4
        %v159 = vpop.permute.xlu0 %158
        %160 = vrot.lane.b32.xlu0 %v142, 4
        %v161 = vpop.permute.xlu0 %160
        %162 = vrot.lane.b32.xlu0 %v143, 4
        %v163 = vpop.permute.xlu0 %162
        %164 = vrot.lane.b32.xlu0 %v144, 4
        %v165 = vpop.permute.xlu0 %164
        %166 = vrot.lane.b32.xlu0 %v145, 4
        %v167 = vpop.permute.xlu0 %166
        %168 = vrot.lane.b32.xlu0 %v146, 4
        %v169 = vpop.permute.xlu0 %168
        %170 = vrot.lane.b32.xlu0 %v147, 4
        %v171 = vpop.permute.xlu0 %170
        %vm180 = vcmask 162848
        %181 = vst.msk [vmem:[#allocation2 + $0x4] sm:$0xff] %vm180, %v157
        %182 = vst.msk [vmem:[#allocation2 + $0xc] sm:$0xff] %vm180, %v159
        %183 = vst.msk [vmem:[#allocation2 + $0x1c] sm:$0xff] %vm180, %v161
        %184 = vst.msk [vmem:[#allocation2 + $0x24] sm:$0xff] %vm180, %v163
        %185 = vst.msk [vmem:[#allocation2 + $0x34] sm:$0xff] %vm180, %v165
        %186 = vst.msk [vmem:[#allocation2 + $0x3c] sm:$0xff] %vm180, %v167
        %187 = vst.msk [vmem:[#allocation2 + $0x4c] sm:$0xff] %vm180, %v169
        %188 = vst.msk [vmem:[#allocation2 + $0x54] sm:$0xff] %vm180, %v171
        %189 = vset.pattern.permute.xlu0 0
        %190 = vperm.xlu0 %189, %v140
        %v191 = vpop.permute.xlu0 %190
        %193 = vset.pattern.permute.xlu0 0
        %194 = vperm.xlu0 %193, %v141
        %v195 = vpop.permute.xlu0 %194
        %197 = vset.pattern.permute.xlu0 0
        %198 = vperm.xlu0 %197, %v142
        %v199 = vpop.permute.xlu0 %198
        %201 = vset.pattern.permute.xlu0 0
        %202 = vperm.xlu0 %201, %v143
        %v203 = vpop.permute.xlu0 %202
        %205 = vset.pattern.permute.xlu0 0
        %206 = vperm.xlu0 %205, %v144
        %v207 = vpop.permute.xlu0 %206
        %209 = vset.pattern.permute.xlu0 0
        %210 = vperm.xlu0 %209, %v145
        %v211 = vpop.permute.xlu0 %210
        %213 = vset.pattern.permute.xlu0 0
        %214 = vperm.xlu0 %213, %v146
        %v215 = vpop.permute.xlu0 %214
        %217 = vset.pattern.permute.xlu0 0
        %218 = vperm.xlu0 %217, %v147
        %v219 = vpop.permute.xlu0 %218
        %vm221 = vcmask 31744
        %222 = vst.msk [vmem:[#allocation2 + $0x4] sm:$0xff] %vm221, %v191
        %223 = vst.msk [vmem:[#allocation2 + $0xc] sm:$0xff] %vm221, %v195
        %224 = vst.msk [vmem:[#allocation2 + $0x1c] sm:$0xff] %vm221, %v199
        %225 = vst.msk [vmem:[#allocation2 + $0x24] sm:$0xff] %vm221, %v203
        %226 = vst.msk [vmem:[#allocation2 + $0x34] sm:$0xff] %vm221, %v207
        %227 = vst.msk [vmem:[#allocation2 + $0x3c] sm:$0xff] %vm221, %v211
        %228 = vst.msk [vmem:[#allocation2 + $0x4c] sm:$0xff] %vm221, %v215
        %229 = vst.msk [vmem:[#allocation2 + $0x54] sm:$0xff] %vm221, %v219
        %230 = vset.pattern.permute.xlu0 15
        %231 = vperm.xlu0 %230, %v140
        %v232 = vpop.permute.xlu0 %231
        %234 = vset.pattern.permute.xlu0 15
        %235 = vperm.xlu0 %234, %v141
        %v236 = vpop.permute.xlu0 %235
        %238 = vset.pattern.permute.xlu0 15
        %239 = vperm.xlu0 %238, %v142
        %v240 = vpop.permute.xlu0 %239
        %242 = vset.pattern.permute.xlu0 15
        %243 = vperm.xlu0 %242, %v143
        %v244 = vpop.permute.xlu0 %243
        %246 = vset.pattern.permute.xlu0 15
        %247 = vperm.xlu0 %246, %v144
        %v248 = vpop.permute.xlu0 %247
        %250 = vset.pattern.permute.xlu0 15
        %251 = vperm.xlu0 %250, %v145
        %v252 = vpop.permute.xlu0 %251
        %254 = vset.pattern.permute.xlu0 15
        %255 = vperm.xlu0 %254, %v146
        %v256 = vpop.permute.xlu0 %255
        %258 = vset.pattern.permute.xlu0 15
        %259 = vperm.xlu0 %258, %v147
        %v260 = vpop.permute.xlu0 %259
        %vm262 = vcmask 195744
        %263 = vst.msk [vmem:[#allocation2 + $0x4] sm:$0xff] %vm262, %v232
        %264 = vst.msk [vmem:[#allocation2 + $0xc] sm:$0xff] %vm262, %v236
        %265 = vst.msk [vmem:[#allocation2 + $0x1c] sm:$0xff] %vm262, %v240
        %266 = vst.msk [vmem:[#allocation2 + $0x24] sm:$0xff] %vm262, %v244
        %267 = vst.msk [vmem:[#allocation2 + $0x34] sm:$0xff] %vm262, %v248
        %268 = vst.msk [vmem:[#allocation2 + $0x3c] sm:$0xff] %vm262, %v252
        %269 = vst.msk [vmem:[#allocation2 + $0x4c] sm:$0xff] %vm262, %v256
        %270 = vst.msk [vmem:[#allocation2 + $0x54] sm:$0xff] %vm262, %v260
        %v271 = vld [vmem:[#allocation2 + $0x4] sm:$0x1]
        %v272 = vld [vmem:[#allocation2 + $0x1c] sm:$0x1]
        %v273 = vld [vmem:[#allocation2 + $0x34] sm:$0x1]
        %v274 = vld [vmem:[#allocation2 + $0x4c] sm:$0x1]
        %v275 = vlaneseq
        %v276 = vshrl.u32 %v275, 7
        %v277 = vsub.s32 0, %v276
        %v278 = vrot.slane %v271, %v277
        %v279 = vlaneseq
        %v280 = vshrl.u32 %v279, 7
        %v281 = vsub.s32 0, %v280
        %v282 = vrot.slane %v272, %v281
        %v283 = vlaneseq
        %v284 = vshrl.u32 %v283, 7
        %v285 = vsub.s32 0, %v284
        %v286 = vrot.slane %v273, %v285
        %v287 = vlaneseq
        %v288 = vshrl.u32 %v287, 7
        %v289 = vsub.s32 0, %v288
        %v290 = vrot.slane %v274, %v289
        %vm291 = vcmask 191488
        %292 = vst.msk [vmem:[#allocation2] sm:$0xf] %vm291, %v278
        %293 = vst.msk [vmem:[#allocation2 + $0x18] sm:$0xf] %vm291, %v282
        %294 = vst.msk [vmem:[#allocation2 + $0x30] sm:$0xf] %vm291, %v286
        %295 = vst.msk [vmem:[#allocation2 + $0x48] sm:$0xf] %vm291, %v290
        %v296 = vld [vmem:[#allocation2 + $0x13] sm:$0x1]
        %v297 = vld [vmem:[#allocation2 + $0x2b] sm:$0x1]
        %v298 = vld [vmem:[#allocation2 + $0x43] sm:$0x1]
        %v299 = vld [vmem:[#allocation2 + $0x5b] sm:$0x1]
        %v300 = vlaneseq
        %v301 = vshrl.u32 %v300, 7
        %v302 = vsub.s32 0, %v301
        %v303 = vrot.slane %v296, %v302
        %v304 = vlaneseq
        %v305 = vshrl.u32 %v304, 7
        %v306 = vsub.s32 0, %v305
        %v307 = vrot.slane %v297, %v306
        %v308 = vlaneseq
        %v309 = vshrl.u32 %v308, 7
        %v310 = vsub.s32 0, %v309
        %v311 = vrot.slane %v298, %v310
        %v312 = vlaneseq
        %v313 = vshrl.u32 %v312, 7
        %v314 = vsub.s32 0, %v313
        %v315 = vrot.slane %v299, %v314
        %316 = vst.msk [vmem:[#allocation2 + $0x14] sm:$0xf] %vm291, %v303
        %317 = vst.msk [vmem:[#allocation2 + $0x2c] sm:$0xf] %vm291, %v307
        %318 = vst.msk [vmem:[#allocation2 + $0x44] sm:$0xf] %vm291, %v311
        %319 = vst.msk [vmem:[#allocation2 + $0x5c] sm:$0xf] %vm291, %v315
        %s320 = smul.u32 %s23, 2
        %s321 = sld [smem:[#allocation4 + %s320]]
        %s322 = sadd.s32 %s320, 1
        %s323 = sld [smem:[#allocation4 + %s322]]
        %s324 = scalar_lea.vmem [#allocation2], %s323
        %v325 = vld [vmem:[%s324] sm:$0xff]
        %v326 = vld [vmem:[%s324 + $0x8] sm:$0xff]
        %v327 = vld [vmem:[%s324 + $0x18] sm:$0xff]
        %v328 = vld [vmem:[%s324 + $0x20] sm:$0xff]
        %v329 = vld [vmem:[%s324 + $0x30] sm:$0xff]
        %v330 = vld [vmem:[%s324 + $0x38] sm:$0xff]
        %v331 = vld [vmem:[%s324 + $0x48] sm:$0xff]
        %v332 = vld [vmem:[%s324 + $0x50] sm:$0xff]
        %p333 = scmp.eq.s32.totalorder %s321, 0
        // Predicated region
        $region29: #{tpu_custom_call.1} parent=23 // pred_check
          %p334 = pneg %p333
        $region30: #{tpu_custom_call.1} parent=23 // pred_check_branch
          %336 = sbr.rel (%p334) target = $region32
        $region31: #{tpu_custom_call.1} parent=23 // pred_region
          %vm337 = vcmask 130048
          %338 = vst.msk [vmem:[%s139] sm:$0xff] %vm337, %v325
          %339 = vst.msk [vmem:[%s139 + $0x8] sm:$0xff] %vm337, %v326
          %340 = vst.msk [vmem:[%s139 + $0x10] sm:$0xff] %vm337, %v327
          %341 = vst.msk [vmem:[%s139 + $0x18] sm:$0xff] %vm337, %v328
          %342 = vst.msk [vmem:[%s139 + $0x20] sm:$0xff] %vm337, %v329
          %343 = vst.msk [vmem:[%s139 + $0x28] sm:$0xff] %vm337, %v330
          %344 = vst.msk [vmem:[%s139 + $0x30] sm:$0xff] %vm337, %v331
          %345 = vst.msk [vmem:[%s139 + $0x38] sm:$0xff] %vm337, %v332
        $region32: #{tpu_custom_call.1} parent=23 // pred_fallthru
          _
        %p346 = scmp.eq.s32.totalorder %s321, 1
        // Predicated region
        $region33: #{tpu_custom_call.1} parent=23 // pred_check
          %p347 = pneg %p346
        $region34: #{tpu_custom_call.1} parent=23 // pred_check_branch
          %349 = sbr.rel (%p347) target = $region36
        $region35: #{tpu_custom_call.1} parent=23 // pred_region
          %358 = vrot.lane.b32.xlu0 %v325, 127
          %v359 = vpop.permute.xlu0 %358
          %360 = vrot.lane.b32.xlu0 %v326, 127
          %v361 = vpop.permute.xlu0 %360
          %362 = vrot.lane.b32.xlu0 %v327, 127
          %v363 = vpop.permute.xlu0 %362
          %364 = vrot.lane.b32.xlu0 %v328, 127
          %v365 = vpop.permute.xlu0 %364
          %366 = vrot.lane.b32.xlu0 %v329, 127
          %v367 = vpop.permute.xlu0 %366
          %368 = vrot.lane.b32.xlu0 %v330, 127
          %v369 = vpop.permute.xlu0 %368
          %370 = vrot.lane.b32.xlu0 %v331, 127
          %v371 = vpop.permute.xlu0 %370
          %372 = vrot.lane.b32.xlu0 %v332, 127
          %v373 = vpop.permute.xlu0 %372
          %vm382 = vcmask 130048
          %383 = vst.msk [vmem:[%s139] sm:$0xff] %vm382, %v359
          %384 = vst.msk [vmem:[%s139 + $0x8] sm:$0xff] %vm382, %v361
          %385 = vst.msk [vmem:[%s139 + $0x10] sm:$0xff] %vm382, %v363
          %386 = vst.msk [vmem:[%s139 + $0x18] sm:$0xff] %vm382, %v365
          %387 = vst.msk [vmem:[%s139 + $0x20] sm:$0xff] %vm382, %v367
          %388 = vst.msk [vmem:[%s139 + $0x28] sm:$0xff] %vm382, %v369
          %389 = vst.msk [vmem:[%s139 + $0x30] sm:$0xff] %vm382, %v371
          %390 = vst.msk [vmem:[%s139 + $0x38] sm:$0xff] %vm382, %v373
        $region36: #{tpu_custom_call.1} parent=23 // pred_fallthru
          _
        %p391 = scmp.eq.s32.totalorder %s321, 2
        // Predicated region
        $region37: #{tpu_custom_call.1} parent=23 // pred_check
          %p392 = pneg %p391
        $region38: #{tpu_custom_call.1} parent=23 // pred_check_branch
          %394 = sbr.rel (%p392) target = $region40
        $region39: #{tpu_custom_call.1} parent=23 // pred_region
          %403 = vrot.lane.b32.xlu0 %v325, 126
          %v404 = vpop.permute.xlu0 %403
          %405 = vrot.lane.b32.xlu0 %v326, 126
          %v406 = vpop.permute.xlu0 %405
          %407 = vrot.lane.b32.xlu0 %v327, 126
          %v408 = vpop.permute.xlu0 %407
          %409 = vrot.lane.b32.xlu0 %v328, 126
          %v410 = vpop.permute.xlu0 %409
          %411 = vrot.lane.b32.xlu0 %v329, 126
          %v412 = vpop.permute.xlu0 %411
          %413 = vrot.lane.b32.xlu0 %v330, 126
          %v414 = vpop.permute.xlu0 %413
          %415 = vrot.lane.b32.xlu0 %v331, 126
          %v416 = vpop.permute.xlu0 %415
          %417 = vrot.lane.b32.xlu0 %v332, 126
          %v418 = vpop.permute.xlu0 %417
          %vm427 = vcmask 130048
          %428 = vst.msk [vmem:[%s139] sm:$0xff] %vm427, %v404
          %429 = vst.msk [vmem:[%s139 + $0x8] sm:$0xff] %vm427, %v406
          %430 = vst.msk [vmem:[%s139 + $0x10] sm:$0xff] %vm427, %v408
          %431 = vst.msk [vmem:[%s139 + $0x18] sm:$0xff] %vm427, %v410
          %432 = vst.msk [vmem:[%s139 + $0x20] sm:$0xff] %vm427, %v412
          %433 = vst.msk [vmem:[%s139 + $0x28] sm:$0xff] %vm427, %v414
          %434 = vst.msk [vmem:[%s139 + $0x30] sm:$0xff] %vm427, %v416
          %435 = vst.msk [vmem:[%s139 + $0x38] sm:$0xff] %vm427, %v418
        $region40: #{tpu_custom_call.1} parent=23 // pred_fallthru
          _
        %p436 = scmp.eq.s32.totalorder %s321, 3
        // Predicated region
        $region41: #{tpu_custom_call.1} parent=23 // pred_check
          %p437 = pneg %p436
        $region42: #{tpu_custom_call.1} parent=23 // pred_check_branch
          %439 = sbr.rel (%p437) target = $region44
        $region43: #{tpu_custom_call.1} parent=23 // pred_region
          %448 = vrot.lane.b32.xlu0 %v325, 125
          %v449 = vpop.permute.xlu0 %448
          %450 = vrot.lane.b32.xlu0 %v326, 125
          %v451 = vpop.permute.xlu0 %450
          %452 = vrot.lane.b32.xlu0 %v327, 125
          %v453 = vpop.permute.xlu0 %452
          %454 = vrot.lane.b32.xlu0 %v328, 125
          %v455 = vpop.permute.xlu0 %454
          %456 = vrot.lane.b32.xlu0 %v329, 125
          %v457 = vpop.permute.xlu0 %456
          %458 = vrot.lane.b32.xlu0 %v330, 125
          %v459 = vpop.permute.xlu0 %458
          %460 = vrot.lane.b32.xlu0 %v331, 125
          %v461 = vpop.permute.xlu0 %460
          %462 = vrot.lane.b32.xlu0 %v332, 125
          %v463 = vpop.permute.xlu0 %462
          %vm472 = vcmask 130048
          %473 = vst.msk [vmem:[%s139] sm:$0xff] %vm472, %v449
          %474 = vst.msk [vmem:[%s139 + $0x8] sm:$0xff] %vm472, %v451
          %475 = vst.msk [vmem:[%s139 + $0x10] sm:$0xff] %vm472, %v453
          %476 = vst.msk [vmem:[%s139 + $0x18] sm:$0xff] %vm472, %v455
          %477 = vst.msk [vmem:[%s139 + $0x20] sm:$0xff] %vm472, %v457
          %478 = vst.msk [vmem:[%s139 + $0x28] sm:$0xff] %vm472, %v459
          %479 = vst.msk [vmem:[%s139 + $0x30] sm:$0xff] %vm472, %v461
          %480 = vst.msk [vmem:[%s139 + $0x38] sm:$0xff] %vm472, %v463
        $region44: #{tpu_custom_call.1} parent=23 // pred_fallthru
          _
        %p481 = scmp.eq.s32.totalorder %s321, 4
        // Predicated region
        $region45: #{tpu_custom_call.1} parent=23 // pred_check
          %p482 = pneg %p481
        $region46: #{tpu_custom_call.1} parent=23 // pred_check_branch
          %484 = sbr.rel (%p482) target = $region48
        $region47: #{tpu_custom_call.1} parent=23 // pred_region
          %493 = vrot.lane.b32.xlu0 %v325, 124
          %v494 = vpop.permute.xlu0 %493
          %495 = vrot.lane.b32.xlu0 %v326, 124
          %v496 = vpop.permute.xlu0 %495
          %497 = vrot.lane.b32.xlu0 %v327, 124
          %v498 = vpop.permute.xlu0 %497
          %499 = vrot.lane.b32.xlu0 %v328, 124
          %v500 = vpop.permute.xlu0 %499
          %501 = vrot.lane.b32.xlu0 %v329, 124
          %v502 = vpop.permute.xlu0 %501
          %503 = vrot.lane.b32.xlu0 %v330, 124
          %v504 = vpop.permute.xlu0 %503
          %505 = vrot.lane.b32.xlu0 %v331, 124
          %v506 = vpop.permute.xlu0 %505
          %507 = vrot.lane.b32.xlu0 %v332, 124
          %v508 = vpop.permute.xlu0 %507
          %vm517 = vcmask 130048
          %518 = vst.msk [vmem:[%s139] sm:$0xff] %vm517, %v494
          %519 = vst.msk [vmem:[%s139 + $0x8] sm:$0xff] %vm517, %v496
          %520 = vst.msk [vmem:[%s139 + $0x10] sm:$0xff] %vm517, %v498
          %521 = vst.msk [vmem:[%s139 + $0x18] sm:$0xff] %vm517, %v500
          %522 = vst.msk [vmem:[%s139 + $0x20] sm:$0xff] %vm517, %v502
          %523 = vst.msk [vmem:[%s139 + $0x28] sm:$0xff] %vm517, %v504
          %524 = vst.msk [vmem:[%s139 + $0x30] sm:$0xff] %vm517, %v506
          %525 = vst.msk [vmem:[%s139 + $0x38] sm:$0xff] %vm517, %v508
        $region48: #{tpu_custom_call.1} parent=23 // pred_fallthru
          _
        %p526 = scmp.eq.s32.totalorder %s321, 5
        // Predicated region
        $region49: #{tpu_custom_call.1} parent=23 // pred_check
          %p527 = pneg %p526
        $region50: #{tpu_custom_call.1} parent=23 // pred_check_branch
          %529 = sbr.rel (%p527) target = $region52
        $region51: #{tpu_custom_call.1} parent=23 // pred_region
          %538 = vrot.lane.b32.xlu0 %v325, 123
          %v539 = vpop.permute.xlu0 %538
          %540 = vrot.lane.b32.xlu0 %v326, 123
          %v541 = vpop.permute.xlu0 %540
          %542 = vrot.lane.b32.xlu0 %v327, 123
          %v543 = vpop.permute.xlu0 %542
          %544 = vrot.lane.b32.xlu0 %v328, 123
          %v545 = vpop.permute.xlu0 %544
          %546 = vrot.lane.b32.xlu0 %v329, 123
          %v547 = vpop.permute.xlu0 %546
          %548 = vrot.lane.b32.xlu0 %v330, 123
          %v549 = vpop.permute.xlu0 %548
          %550 = vrot.lane.b32.xlu0 %v331, 123
          %v551 = vpop.permute.xlu0 %550
          %552 = vrot.lane.b32.xlu0 %v332, 123
          %v553 = vpop.permute.xlu0 %552
          %vm562 = vcmask 130048
          %563 = vst.msk [vmem:[%s139] sm:$0xff] %vm562, %v539
          %564 = vst.msk [vmem:[%s139 + $0x8] sm:$0xff] %vm562, %v541
          %565 = vst.msk [vmem:[%s139 + $0x10] sm:$0xff] %vm562, %v543
          %566 = vst.msk [vmem:[%s139 + $0x18] sm:$0xff] %vm562, %v545
          %567 = vst.msk [vmem:[%s139 + $0x20] sm:$0xff] %vm562, %v547
          %568 = vst.msk [vmem:[%s139 + $0x28] sm:$0xff] %vm562, %v549
          %569 = vst.msk [vmem:[%s139 + $0x30] sm:$0xff] %vm562, %v551
          %570 = vst.msk [vmem:[%s139 + $0x38] sm:$0xff] %vm562, %v553
        $region52: #{tpu_custom_call.1} parent=23 // pred_fallthru
          _
        %p571 = scmp.eq.s32.totalorder %s321, 6
        // Predicated region
        $region53: #{tpu_custom_call.1} parent=23 // pred_check
          %p572 = pneg %p571
        $region54: #{tpu_custom_call.1} parent=23 // pred_check_branch
          %574 = sbr.rel (%p572) target = $region56
        $region55: #{tpu_custom_call.1} parent=23 // pred_region
          %583 = vrot.lane.b32.xlu0 %v325, 122
          %v584 = vpop.permute.xlu0 %583
          %585 = vrot.lane.b32.xlu0 %v326, 122
          %v586 = vpop.permute.xlu0 %585
          %587 = vrot.lane.b32.xlu0 %v327, 122
          %v588 = vpop.permute.xlu0 %587
          %589 = vrot.lane.b32.xlu0 %v328, 122
          %v590 = vpop.permute.xlu0 %589
          %591 = vrot.lane.b32.xlu0 %v329, 122
          %v592 = vpop.permute.xlu0 %591
          %593 = vrot.lane.b32.xlu0 %v330, 122
          %v594 = vpop.permute.xlu0 %593
          %595 = vrot.lane.b32.xlu0 %v331, 122
          %v596 = vpop.permute.xlu0 %595
          %597 = vrot.lane.b32.xlu0 %v332, 122
          %v598 = vpop.permute.xlu0 %597
          %vm607 = vcmask 130048
          %608 = vst.msk [vmem:[%s139] sm:$0xff] %vm607, %v584
          %609 = vst.msk [vmem:[%s139 + $0x8] sm:$0xff] %vm607, %v586
          %610 = vst.msk [vmem:[%s139 + $0x10] sm:$0xff] %vm607, %v588
          %611 = vst.msk [vmem:[%s139 + $0x18] sm:$0xff] %vm607, %v590
          %612 = vst.msk [vmem:[%s139 + $0x20] sm:$0xff] %vm607, %v592
          %613 = vst.msk [vmem:[%s139 + $0x28] sm:$0xff] %vm607, %v594
          %614 = vst.msk [vmem:[%s139 + $0x30] sm:$0xff] %vm607, %v596
          %615 = vst.msk [vmem:[%s139 + $0x38] sm:$0xff] %vm607, %v598
        $region56: #{tpu_custom_call.1} parent=23 // pred_fallthru
          _
        %p616 = scmp.eq.s32.totalorder %s321, 7
        // Predicated region
        $region57: #{tpu_custom_call.1} parent=23 // pred_check
          %p617 = pneg %p616
        $region58: #{tpu_custom_call.1} parent=23 // pred_check_branch
          %619 = sbr.rel (%p617) target = $region60
        $region59: #{tpu_custom_call.1} parent=23 // pred_region
          %628 = vrot.lane.b32.xlu0 %v325, 121
          %v629 = vpop.permute.xlu0 %628
          %630 = vrot.lane.b32.xlu0 %v326, 121
          %v631 = vpop.permute.xlu0 %630
          %632 = vrot.lane.b32.xlu0 %v327, 121
          %v633 = vpop.permute.xlu0 %632
          %634 = vrot.lane.b32.xlu0 %v328, 121
          %v635 = vpop.permute.xlu0 %634
          %636 = vrot.lane.b32.xlu0 %v329, 121
          %v637 = vpop.permute.xlu0 %636
          %638 = vrot.lane.b32.xlu0 %v330, 121
          %v639 = vpop.permute.xlu0 %638
          %640 = vrot.lane.b32.xlu0 %v331, 121
          %v641 = vpop.permute.xlu0 %640
          %642 = vrot.lane.b32.xlu0 %v332, 121
          %v643 = vpop.permute.xlu0 %642
          %vm652 = vcmask 130048
          %653 = vst.msk [vmem:[%s139] sm:$0xff] %vm652, %v629
          %654 = vst.msk [vmem:[%s139 + $0x8] sm:$0xff] %vm652, %v631
          %655 = vst.msk [vmem:[%s139 + $0x10] sm:$0xff] %vm652, %v633
          %656 = vst.msk [vmem:[%s139 + $0x18] sm:$0xff] %vm652, %v635
          %657 = vst.msk [vmem:[%s139 + $0x20] sm:$0xff] %vm652, %v637
          %658 = vst.msk [vmem:[%s139 + $0x28] sm:$0xff] %vm652, %v639
          %659 = vst.msk [vmem:[%s139 + $0x30] sm:$0xff] %vm652, %v641
          %660 = vst.msk [vmem:[%s139 + $0x38] sm:$0xff] %vm652, %v643
        $region60: #{tpu_custom_call.1} parent=23 // pred_fallthru
          _
        %p661 = scmp.eq.s32.totalorder %s321, 8
        // Predicated region
        $region61: #{tpu_custom_call.1} parent=23 // pred_check
          %p662 = pneg %p661
        $region62: #{tpu_custom_call.1} parent=23 // pred_check_branch
          %664 = sbr.rel (%p662) target = $region64
        $region63: #{tpu_custom_call.1} parent=23 // pred_region
          %673 = vrot.lane.b32.xlu0 %v325, 120
          %v674 = vpop.permute.xlu0 %673
          %675 = vrot.lane.b32.xlu0 %v326, 120
          %v676 = vpop.permute.xlu0 %675
          %677 = vrot.lane.b32.xlu0 %v327, 120
          %v678 = vpop.permute.xlu0 %677
          %679 = vrot.lane.b32.xlu0 %v328, 120
          %v680 = vpop.permute.xlu0 %679
          %681 = vrot.lane.b32.xlu0 %v329, 120
          %v682 = vpop.permute.xlu0 %681
          %683 = vrot.lane.b32.xlu0 %v330, 120
          %v684 = vpop.permute.xlu0 %683
          %685 = vrot.lane.b32.xlu0 %v331, 120
          %v686 = vpop.permute.xlu0 %685
          %687 = vrot.lane.b32.xlu0 %v332, 120
          %v688 = vpop.permute.xlu0 %687
          %vm697 = vcmask 130048
          %698 = vst.msk [vmem:[%s139] sm:$0xff] %vm697, %v674
          %699 = vst.msk [vmem:[%s139 + $0x8] sm:$0xff] %vm697, %v676
          %700 = vst.msk [vmem:[%s139 + $0x10] sm:$0xff] %vm697, %v678
          %701 = vst.msk [vmem:[%s139 + $0x18] sm:$0xff] %vm697, %v680
          %702 = vst.msk [vmem:[%s139 + $0x20] sm:$0xff] %vm697, %v682
          %703 = vst.msk [vmem:[%s139 + $0x28] sm:$0xff] %vm697, %v684
          %704 = vst.msk [vmem:[%s139 + $0x30] sm:$0xff] %vm697, %v686
          %705 = vst.msk [vmem:[%s139 + $0x38] sm:$0xff] %vm697, %v688
        $region64: #{tpu_custom_call.1} parent=23 // pred_fallthru
          _
        %s706 = sand.u32 %s57, 1
        %s707 = scalar_lea.sflag [#allocation7], %s706
        %s708 = sand.u32 %s57, 1
        %s709 = smul.addr %s708, 64
        %s710 = scalar_lea.vmem [#allocation8], %s709
        // Predicated region
        $region65: #{tpu_custom_call.1} parent=23 // pred_check
          %p711 = pneg %p67
        $region66: #{tpu_custom_call.1} parent=23 // pred_check_branch
          %713 = sbr.rel (%p711) target = $region68
        $region67: #{tpu_custom_call.1} parent=23 // pred_region
          %s715 = ssub.s32 1024, 1024
          %716 = vsyncadd %s707, %s715
          %s717 = smul.addr %s23, 8
          %s718 = smul.addr %s717, 128
          %s719 = scalar_lea.hbm %s2, %s718
          %s720 = sshll.u32 %s710, 4
          %s721 = int_to_ptr.vmem [resolvable:$true] %s720
          %726 = dma.vmem_to_hbm [thread:$0]  %s721, 1024, %s719, %s707, 128, 128, 8
        $region68: #{tpu_custom_call.1} parent=23 // pred_fallthru
          _
      $region24: #{tpu_custom_call.1} parent=5 // pred_fallthru
        _
      %p727 = scmp.le.s32.totalorder 2, %s18
      // Predicated region
      $region69: #{tpu_custom_call.1} parent=5 // pred_check
        %p728 = pneg %p727
      $region70: #{tpu_custom_call.1} parent=5 // pred_check_branch
        %730 = sbr.rel (%p728) target = $region72
      $region71: #{tpu_custom_call.1} parent=5 // pred_region
        %s731 = ssub.s32 %s18, 2
        // Predicated region
        $region73: #{tpu_custom_call.1} parent=71 // pred_check
          %p732 = pneg %p73
        $region74: #{tpu_custom_call.1} parent=71 // pred_check_branch
          %734 = sbr.rel (%p732) target = $region76
        $region75: #{tpu_custom_call.1} parent=71 // pred_region
          %s735 = sand.u32 %s58, 1
          %s736 = scalar_lea.sflag [#allocation7], %s735
          %s737 = sand.u32 %s58, 1
          %s738 = smul.addr %s737, 64
          %s739 = scalar_lea.vmem [#allocation8], %s738
          %740 = dma.done %s736, 1024
        $region76: #{tpu_custom_call.1} parent=71 // pred_fallthru
          _
      $region72: #{tpu_custom_call.1} parent=5 // pred_fallthru
        _
    $region6: #{tpu_custom_call.1} parent=1 // loop_footer
      %s22 = sadd.s32 1, %s18
    $region7: #{tpu_custom_call.1} parent=1 // loop_footer_branch
      %17 = sbr.rel target = $region3
    $region8: #{tpu_custom_call.1} parent=1 // loop_exit
      _
    %741 = vsyncpa [#allocation6], 1
    %s742 = scalar_lea.sflag [#allocation6], 1
    %743 = vsyncpa %s742, 1
    %744 = vsyncpa [#allocation7], 1
    %s745 = scalar_lea.sflag [#allocation7], 1
    %746 = vsyncpa %s745, 1

</llo_original>
